<compile_context>
chip_gen: v6e
topology: v6e:2x2x1
jax: 0.10.0
libtpu: 0.0.40
codegen_flags: <defaults>
</compile_context>

<pallas_src>
import functools

import jax
import jax.numpy as jnp
from jax.experimental import pallas as pl
from jax.experimental.pallas import tpu as pltpu


# ----------------------------- fused Pallas kernel ---------------------------

def _decoder_step_kernel(ids_ref, emb_ref, h0_ref, c0_ref, *rest):
    """One full decoder step.

    ids:  (B, 1)  int32 token ids
    emb:  (V, E)  embedding table (resident in VMEM)
    h0,c0:(L, B, H) previous recurrent state
    rest: L x w_cat (in_l+H, 4H), L x b (1, 4H), w_out (H, O_pad), b_out (1, O_pad),
          then outputs h_n (L,B,H), c_n (L,B,H), logits (B, O_pad).
    """
    L, _, H = h0_ref.shape
    w_refs = rest[:L]
    b_refs = rest[L:2 * L]
    w_out_ref, b_out_ref, h_out_ref, c_out_ref, logits_ref = rest[2 * L:]

    # ---- embedding lookup as a one-hot matmul (in-kernel gather) ----
    ids = ids_ref[...]                                            # (B, 1) int32
    vocab = emb_ref.shape[0]
    col = jax.lax.broadcasted_iota(jnp.int32, (ids.shape[0], vocab), 1)
    one_hot = (ids == col).astype(jnp.float32)                    # (B, V)
    x = jnp.dot(one_hot, emb_ref[...].astype(jnp.float32),
                preferred_element_type=jnp.float32)               # (B, E)
    # embedding_dropout: identity (eval mode).

    # ---- unrolled multi-layer LSTM step ----
    for layer in range(L):
        h_prev = h0_ref[layer].astype(jnp.float32)                # (B, H)
        c_prev = c0_ref[layer].astype(jnp.float32)                # (B, H)

        xh = jnp.concatenate([x, h_prev], axis=-1)                # (B, in+H)
        gates = (jnp.dot(xh, w_refs[layer][...],
                         preferred_element_type=jnp.float32)
                 + b_refs[layer][...].astype(jnp.float32))        # (B, 4H)

        # Full-width nonlinearities (EUP) + one mask select; PyTorch gate order [i,f,g,o].
        gcol = jax.lax.broadcasted_iota(jnp.int32, gates.shape, 1)
        is_g = (gcol >= 2 * H) & (gcol < 3 * H)
        act = jnp.where(is_g, jnp.tanh(gates), jax.nn.sigmoid(gates))

        i_g = act[:, 0 * H:1 * H]
        f_g = act[:, 1 * H:2 * H]
        g_g = act[:, 2 * H:3 * H]
        o_g = act[:, 3 * H:4 * H]

        c_new = f_g * c_prev + i_g * g_g
        h_new = o_g * jnp.tanh(c_new)

        h_out_ref[layer] = h_new.astype(h_out_ref.dtype)
        c_out_ref[layer] = c_new.astype(c_out_ref.dtype)
        # inter-layer LSTM dropout: identity (eval mode).
        x = h_new

    # ---- output Linear (lane-dense, padded to multiple of 128 columns) ----
    logits = (jnp.dot(x, w_out_ref[...], preferred_element_type=jnp.float32)
              + b_out_ref[...].astype(jnp.float32))
    logits_ref[...] = logits.astype(logits_ref.dtype)
    # F.log_softmax(logits) is computed in torch but never returned -> omitted.


# ----------------------------- wrapper ----------------------------------------

@functools.partial(jax.jit, static_argnames=("output_size",))
def decoder_forward(input_ids, h0, c0, params, *, output_size):
    """Mirrors Decoder.forward.

    input_ids: (1, B) int32 (seq_len == 1 decode step)
    h0, c0:    (num_layers, B, H)
    returns ((h_n, c_n), logits) with logits (B, output_size).
    """
    L, B, H = h0.shape
    O_pad = params["w_out"].shape[1]
    num_layers = len(params["w_cat"])
    assert num_layers == L

    ids = input_ids.reshape(B, 1).astype(jnp.int32)

    vmem = pl.BlockSpec(memory_space=pltpu.MemorySpace.VMEM)
    n_in = 4 + 2 * num_layers + 2

    h_n, c_n, logits_pad = pl.pallas_call(
        _decoder_step_kernel,
        out_shape=(
            jax.ShapeDtypeStruct((L, B, H), jnp.float32),
            jax.ShapeDtypeStruct((L, B, H), jnp.float32),
            jax.ShapeDtypeStruct((B, O_pad), jnp.float32),
        ),
        in_specs=[vmem] * n_in,
        out_specs=(vmem, vmem, vmem),
        # Recurrent-state buffers updated in place (decode loops reuse them):
        # inputs: ids(0), emb(1), h0(2), c0(3), ... ; outputs: h_n(0), c_n(1), logits(2)
        input_output_aliases={2: 0, 3: 1},
    )(ids, params["embedding"], h0, c0,
      *params["w_cat"], *params["b"], params["w_out"], params["b_out"])

    logits = logits_pad[:, :output_size]   # drop lane padding
    return (h_n, c_n), logits


# ----------------------------- parameter init ---------------------------------

def init_params(key, vocab_size, embedding_dim, hidden_size, output_size, num_layers):
    keys = jax.random.split(key, 3 + 4 * num_layers)
    scale = 0.1
    E, H = embedding_dim, hidden_size

    params = {}
    params["embedding"] = scale * jax.random.normal(
        keys[0], (vocab_size, E), jnp.float32)

    w_cat, b = [], []
    for layer in range(num_layers):
        in_dim = E if layer == 0 else H
        k_ih, k_hh, k_bi, k_bh = keys[1 + 4 * layer: 5 + 4 * layer]
        # PyTorch stores (4H, in); we store transposed (in, 4H) and pre-concatenate
        # [W_ih; W_hh] so the kernel does a single [x, h] @ W_cat matmul.
        w_ih_t = scale * jax.random.normal(k_ih, (in_dim, 4 * H), jnp.float32)
        w_hh_t = scale * jax.random.normal(k_hh, (H, 4 * H), jnp.float32)
        b_ih = scale * jax.random.normal(k_bi, (4 * H,), jnp.float32)
        b_hh = scale * jax.random.normal(k_bh, (4 * H,), jnp.float32)
        w_cat.append(jnp.concatenate([w_ih_t, w_hh_t], axis=0))    # (in+H, 4H)
        b.append((b_ih + b_hh).reshape(1, 4 * H))
    params["w_cat"] = tuple(w_cat)
    params["b"] = tuple(b)

    k_w, k_b = keys[1 + 4 * num_layers], keys[2 + 4 * num_layers]
    w_out = scale * jax.random.normal(k_w, (H, output_size), jnp.float32)
    b_out = scale * jax.random.normal(k_b, (output_size,), jnp.float32)

    # Lane-dense padding: pad output columns to a multiple of 128 (unmasked stores).
    o_pad = ((output_size + 127) // 128) * 128
    params["w_out"] = jnp.zeros((H, o_pad), jnp.float32).at[:, :output_size].set(w_out)
    params["b_out"] = jnp.zeros((1, o_pad), jnp.float32).at[0, :output_size].set(b_out)
    return params


# ----------------------------- pure-JAX reference ------------------------------

def decoder_reference(input_ids, h0, c0, params, *, output_size):
    hp = jax.lax.Precision.HIGHEST
    x = jnp.take(params["embedding"], input_ids[0], axis=0)        # (B, E)
    L, _, H = h0.shape
    hs, cs = [], []
    for layer in range(L):
        xh = jnp.concatenate([x, h0[layer]], axis=-1)
        gates = jnp.dot(xh, params["w_cat"][layer], precision=hp) + params["b"][layer]
        i_g = jax.nn.sigmoid(gates[:, 0 * H:1 * H])
        f_g = jax.nn.sigmoid(gates[:, 1 * H:2 * H])
        g_g = jnp.tanh(gates[:, 2 * H:3 * H])
        o_g = jax.nn.sigmoid(gates[:, 3 * H:4 * H])
        c_new = f_g * c0[layer] + i_g * g_g
        h_new = o_g * jnp.tanh(c_new)
        hs.append(h_new)
        cs.append(c_new)
        x = h_new
    logits = (jnp.dot(x, params["w_out"], precision=hp) + params["b_out"])[:, :output_size]
    return (jnp.stack(hs), jnp.stack(cs)), logits


# ----------------------------- main --------------------------------------------

if __name__ == "__main__":
    vocab_size = 64          # embedding.num_embeddings == output_size in the chatbot
    embedding_dim = 32
    hidden_size = 32
    output_size = 64
    num_layers = 2
    batch = 2

    root = jax.random.PRNGKey(0)
    k_params, k_ids, k_h, k_c = jax.random.split(root, 4)

    params = init_params(k_params, vocab_size, embedding_dim,
                         hidden_size, output_size, num_layers)

    input_ids = jax.random.randint(k_ids, (1, batch), 0, vocab_size, jnp.int32)
    h0 = 0.1 * jax.random.normal(k_h, (num_layers, batch, hidden_size), jnp.float32)
    c0 = 0.1 * jax.random.normal(k_c, (num_layers, batch, hidden_size), jnp.float32)

    (h_n, c_n), logits = decoder_forward(input_ids, h0, c0, params,
                                         output_size=output_size)
    jax.block_until_ready((h_n, c_n, logits))

    assert h_n.shape == (num_layers, batch, hidden_size)
    assert c_n.shape == (num_layers, batch, hidden_size)
    assert logits.shape == (batch, output_size)

    # Numerical check against a pure-JAX reference.
    (h_ref, c_ref), logits_ref = decoder_reference(input_ids, h0, c0, params,
                                                   output_size=output_size)
    assert jnp.allclose(h_n, h_ref, rtol=1e-2, atol=1e-3)
    assert jnp.allclose(c_n, c_ref, rtol=1e-2, atol=1e-3)
    assert jnp.allclose(logits, logits_ref, rtol=1e-2, atol=1e-3)

    print("KERNEL_OK")
</pallas_src>

<mosaic_0001>
module attributes {stable_mosaic.version = 11 : i64} {
  func.func @_decoder_step_kernel(%arg0: memref<2x1xi32, #tpu.memory_space<vmem>>, %arg1: memref<64x32xf32, #tpu.memory_space<vmem>>, %arg2: memref<2x2x32xf32, #tpu.memory_space<vmem>>, %arg3: memref<2x2x32xf32, #tpu.memory_space<vmem>>, %arg4: memref<64x128xf32, #tpu.memory_space<vmem>>, %arg5: memref<64x128xf32, #tpu.memory_space<vmem>>, %arg6: memref<1x128xf32, #tpu.memory_space<vmem>>, %arg7: memref<1x128xf32, #tpu.memory_space<vmem>>, %arg8: memref<32x128xf32, #tpu.memory_space<vmem>>, %arg9: memref<1x128xf32, #tpu.memory_space<vmem>>, %arg10: memref<2x2x32xf32, #tpu.memory_space<vmem>>, %arg11: memref<2x2x32xf32, #tpu.memory_space<vmem>>, %arg12: memref<2x128xf32, #tpu.memory_space<vmem>>) attributes {dimension_semantics = [], scalar_prefetch = 0 : i64, scratch_operands = 0 : i64, tpu.core_type = #tpu.core_type<tc>} {
    %c0 = arith.constant 0 : index
    %c0_0 = arith.constant 0 : index
    %0 = vector.load %arg0[%c0, %c0_0] : memref<2x1xi32, #tpu.memory_space<vmem>>, vector<2x1xi32>
    %1 = tpu.iota {dimensions = array<i32: 1>} : vector<2x64xi32>
    %2 = vector.broadcast %0 : vector<2x1xi32> to vector<2x64xi32>
    %3 = arith.cmpi eq, %2, %1 : vector<2x64xi32>
    %4 = arith.extui %3 : vector<2x64xi1> to vector<2x64xi32>
    %5 = arith.sitofp %4 : vector<2x64xi32> to vector<2x64xf32>
    %c0_1 = arith.constant 0 : index
    %c0_2 = arith.constant 0 : index
    %6 = vector.load %arg1[%c0_1, %c0_2] : memref<64x32xf32, #tpu.memory_space<vmem>>, vector<64x32xf32>
    %cst = arith.constant dense<0.000000e+00> : vector<2x32xf32>
    %7 = tpu.matmul %5, %6, %cst {dimension_numbers = #tpu.dot_dimension_numbers<[1], [0], [0], [1], [0, 0, 1, 1], [], []>} : vector<2x64xf32>, vector<64x32xf32>, vector<2x32xf32> -> vector<2x32xf32>
    %c0_3 = arith.constant 0 : index
    %c0_4 = arith.constant 0 : index
    %c0_5 = arith.constant 0 : index
    %8 = vector.load %arg2[%c0_3, %c0_4, %c0_5] : memref<2x2x32xf32, #tpu.memory_space<vmem>>, vector<1x2x32xf32>
    %9 = vector.shape_cast %8 : vector<1x2x32xf32> to vector<2x32xf32>
    %c0_6 = arith.constant 0 : index
    %c0_7 = arith.constant 0 : index
    %c0_8 = arith.constant 0 : index
    %10 = vector.load %arg3[%c0_6, %c0_7, %c0_8] : memref<2x2x32xf32, #tpu.memory_space<vmem>>, vector<1x2x32xf32>
    %11 = vector.shape_cast %10 : vector<1x2x32xf32> to vector<2x32xf32>
    %12 = tpu.concatenate %7, %9 in 1 : vector<2x32xf32>, vector<2x32xf32> -> vector<2x64xf32>
    %c0_9 = arith.constant 0 : index
    %c0_10 = arith.constant 0 : index
    %13 = vector.load %arg4[%c0_9, %c0_10] : memref<64x128xf32, #tpu.memory_space<vmem>>, vector<64x128xf32>
    %cst_11 = arith.constant dense<0.000000e+00> : vector<2x128xf32>
    %14 = tpu.matmul %12, %13, %cst_11 {dimension_numbers = #tpu.dot_dimension_numbers<[1], [0], [0], [1], [0, 0, 1, 1], [], []>} : vector<2x64xf32>, vector<64x128xf32>, vector<2x128xf32> -> vector<2x128xf32>
    %c0_12 = arith.constant 0 : index
    %c0_13 = arith.constant 0 : index
    %15 = vector.load %arg6[%c0_12, %c0_13] : memref<1x128xf32, #tpu.memory_space<vmem>>, vector<1x128xf32>
    %16 = vector.broadcast %15 : vector<1x128xf32> to vector<2x128xf32>
    %17 = arith.addf %14, %16 : vector<2x128xf32>
    %18 = tpu.iota {dimensions = array<i32: 1>} : vector<2x128xi32>
    %c64_i32 = arith.constant 64 : i32
    %19 = vector.broadcast %c64_i32 : i32 to vector<2x128xi32>
    %20 = arith.cmpi sge, %18, %19 : vector<2x128xi32>
    %c96_i32 = arith.constant 96 : i32
    %21 = vector.broadcast %c96_i32 : i32 to vector<2x128xi32>
    %22 = arith.cmpi slt, %18, %21 : vector<2x128xi32>
    %23 = arith.andi %20, %22 : vector<2x128xi1>
    %24 = math.tanh %17 : vector<2x128xf32>
    %25 = arith.negf %17 : vector<2x128xf32>
    %26 = math.exp %25 : vector<2x128xf32>
    %cst_14 = arith.constant 1.000000e+00 : f32
    %27 = vector.broadcast %cst_14 : f32 to vector<2x128xf32>
    %28 = arith.addf %27, %26 : vector<2x128xf32>
    %29 = arith.divf %27, %28 : vector<2x128xf32>
    %30 = arith.select %23, %24, %29 : vector<2x128xi1>, vector<2x128xf32>
    %31 = vector.extract_strided_slice %30 {offsets = [0, 0], sizes = [2, 32], strides = [1, 1]} : vector<2x128xf32> to vector<2x32xf32>
    %32 = vector.extract_strided_slice %30 {offsets = [0, 32], sizes = [2, 32], strides = [1, 1]} : vector<2x128xf32> to vector<2x32xf32>
    %33 = vector.extract_strided_slice %30 {offsets = [0, 64], sizes = [2, 32], strides = [1, 1]} : vector<2x128xf32> to vector<2x32xf32>
    %34 = vector.extract_strided_slice %30 {offsets = [0, 96], sizes = [2, 32], strides = [1, 1]} : vector<2x128xf32> to vector<2x32xf32>
    %35 = arith.mulf %32, %11 : vector<2x32xf32>
    %36 = arith.mulf %31, %33 : vector<2x32xf32>
    %37 = arith.addf %35, %36 : vector<2x32xf32>
    %38 = math.tanh %37 : vector<2x32xf32>
    %39 = arith.mulf %34, %38 : vector<2x32xf32>
    %c0_15 = arith.constant 0 : index
    %c0_16 = arith.constant 0 : index
    %c0_17 = arith.constant 0 : index
    %40 = vector.load %arg10[%c0_15, %c0_16, %c0_17] : memref<2x2x32xf32, #tpu.memory_space<vmem>>, vector<1x2x32xf32>
    %41 = vector.shape_cast %40 : vector<1x2x32xf32> to vector<2x32xf32>
    %42 = vector.shape_cast %39 : vector<2x32xf32> to vector<1x2x32xf32>
    tpu.vector_store %arg10[%c0_15, %c0_16, %c0_17], %42 {strides = array<i32>} : memref<2x2x32xf32, #tpu.memory_space<vmem>>, vector<1x2x32xf32>,
    %c0_18 = arith.constant 0 : index
    %c0_19 = arith.constant 0 : index
    %c0_20 = arith.constant 0 : index
    %43 = vector.load %arg11[%c0_18, %c0_19, %c0_20] : memref<2x2x32xf32, #tpu.memory_space<vmem>>, vector<1x2x32xf32>
    %44 = vector.shape_cast %43 : vector<1x2x32xf32> to vector<2x32xf32>
    %45 = vector.shape_cast %37 : vector<2x32xf32> to vector<1x2x32xf32>
    tpu.vector_store %arg11[%c0_18, %c0_19, %c0_20], %45 {strides = array<i32>} : memref<2x2x32xf32, #tpu.memory_space<vmem>>, vector<1x2x32xf32>,
    %c1 = arith.constant 1 : index
    %c0_21 = arith.constant 0 : index
    %c0_22 = arith.constant 0 : index
    %46 = vector.load %arg2[%c1, %c0_21, %c0_22] : memref<2x2x32xf32, #tpu.memory_space<vmem>>, vector<1x2x32xf32>
    %47 = vector.shape_cast %46 : vector<1x2x32xf32> to vector<2x32xf32>
    %c1_23 = arith.constant 1 : index
    %c0_24 = arith.constant 0 : index
    %c0_25 = arith.constant 0 : index
    %48 = vector.load %arg3[%c1_23, %c0_24, %c0_25] : memref<2x2x32xf32, #tpu.memory_space<vmem>>, vector<1x2x32xf32>
    %49 = vector.shape_cast %48 : vector<1x2x32xf32> to vector<2x32xf32>
    %50 = tpu.concatenate %39, %47 in 1 : vector<2x32xf32>, vector<2x32xf32> -> vector<2x64xf32>
    %c0_26 = arith.constant 0 : index
    %c0_27 = arith.constant 0 : index
    %51 = vector.load %arg5[%c0_26, %c0_27] : memref<64x128xf32, #tpu.memory_space<vmem>>, vector<64x128xf32>
    %cst_28 = arith.constant dense<0.000000e+00> : vector<2x128xf32>
    %52 = tpu.matmul %50, %51, %cst_28 {dimension_numbers = #tpu.dot_dimension_numbers<[1], [0], [0], [1], [0, 0, 1, 1], [], []>} : vector<2x64xf32>, vector<64x128xf32>, vector<2x128xf32> -> vector<2x128xf32>
    %c0_29 = arith.constant 0 : index
    %c0_30 = arith.constant 0 : index
    %53 = vector.load %arg7[%c0_29, %c0_30] : memref<1x128xf32, #tpu.memory_space<vmem>>, vector<1x128xf32>
    %54 = vector.broadcast %53 : vector<1x128xf32> to vector<2x128xf32>
    %55 = arith.addf %52, %54 : vector<2x128xf32>
    %56 = tpu.iota {dimensions = array<i32: 1>} : vector<2x128xi32>
    %c64_i32_31 = arith.constant 64 : i32
    %57 = vector.broadcast %c64_i32_31 : i32 to vector<2x128xi32>
    %58 = arith.cmpi sge, %56, %57 : vector<2x128xi32>
    %c96_i32_32 = arith.constant 96 : i32
    %59 = vector.broadcast %c96_i32_32 : i32 to vector<2x128xi32>
    %60 = arith.cmpi slt, %56, %59 : vector<2x128xi32>
    %61 = arith.andi %58, %60 : vector<2x128xi1>
    %62 = math.tanh %55 : vector<2x128xf32>
    %63 = arith.negf %55 : vector<2x128xf32>
    %64 = math.exp %63 : vector<2x128xf32>
    %cst_33 = arith.constant 1.000000e+00 : f32
    %65 = vector.broadcast %cst_33 : f32 to vector<2x128xf32>
    %66 = arith.addf %65, %64 : vector<2x128xf32>
    %67 = arith.divf %65, %66 : vector<2x128xf32>
    %68 = arith.select %61, %62, %67 : vector<2x128xi1>, vector<2x128xf32>
    %69 = vector.extract_strided_slice %68 {offsets = [0, 0], sizes = [2, 32], strides = [1, 1]} : vector<2x128xf32> to vector<2x32xf32>
    %70 = vector.extract_strided_slice %68 {offsets = [0, 32], sizes = [2, 32], strides = [1, 1]} : vector<2x128xf32> to vector<2x32xf32>
    %71 = vector.extract_strided_slice %68 {offsets = [0, 64], sizes = [2, 32], strides = [1, 1]} : vector<2x128xf32> to vector<2x32xf32>
    %72 = vector.extract_strided_slice %68 {offsets = [0, 96], sizes = [2, 32], strides = [1, 1]} : vector<2x128xf32> to vector<2x32xf32>
    %73 = arith.mulf %70, %49 : vector<2x32xf32>
    %74 = arith.mulf %69, %71 : vector<2x32xf32>
    %75 = arith.addf %73, %74 : vector<2x32xf32>
    %76 = math.tanh %75 : vector<2x32xf32>
    %77 = arith.mulf %72, %76 : vector<2x32xf32>
    %c1_34 = arith.constant 1 : index
    %c0_35 = arith.constant 0 : index
    %c0_36 = arith.constant 0 : index
    %78 = vector.load %arg10[%c1_34, %c0_35, %c0_36] : memref<2x2x32xf32, #tpu.memory_space<vmem>>, vector<1x2x32xf32>
    %79 = vector.shape_cast %78 : vector<1x2x32xf32> to vector<2x32xf32>
    %80 = vector.shape_cast %77 : vector<2x32xf32> to vector<1x2x32xf32>
    tpu.vector_store %arg10[%c1_34, %c0_35, %c0_36], %80 {strides = array<i32>} : memref<2x2x32xf32, #tpu.memory_space<vmem>>, vector<1x2x32xf32>,
    %c1_37 = arith.constant 1 : index
    %c0_38 = arith.constant 0 : index
    %c0_39 = arith.constant 0 : index
    %81 = vector.load %arg11[%c1_37, %c0_38, %c0_39] : memref<2x2x32xf32, #tpu.memory_space<vmem>>, vector<1x2x32xf32>
    %82 = vector.shape_cast %81 : vector<1x2x32xf32> to vector<2x32xf32>
    %83 = vector.shape_cast %75 : vector<2x32xf32> to vector<1x2x32xf32>
    tpu.vector_store %arg11[%c1_37, %c0_38, %c0_39], %83 {strides = array<i32>} : memref<2x2x32xf32, #tpu.memory_space<vmem>>, vector<1x2x32xf32>,
    %c0_40 = arith.constant 0 : index
    %c0_41 = arith.constant 0 : index
    %84 = vector.load %arg8[%c0_40, %c0_41] : memref<32x128xf32, #tpu.memory_space<vmem>>, vector<32x128xf32>
    %cst_42 = arith.constant dense<0.000000e+00> : vector<2x128xf32>
    %85 = tpu.matmul %77, %84, %cst_42 {dimension_numbers = #tpu.dot_dimension_numbers<[1], [0], [0], [1], [0, 0, 1, 1], [], []>} : vector<2x32xf32>, vector<32x128xf32>, vector<2x128xf32> -> vector<2x128xf32>
    %c0_43 = arith.constant 0 : index
    %c0_44 = arith.constant 0 : index
    %86 = vector.load %arg9[%c0_43, %c0_44] : memref<1x128xf32, #tpu.memory_space<vmem>>, vector<1x128xf32>
    %87 = vector.broadcast %86 : vector<1x128xf32> to vector<2x128xf32>
    %88 = arith.addf %85, %87 : vector<2x128xf32>
    %c0_45 = arith.constant 0 : index
    %c0_46 = arith.constant 0 : index
    %89 = vector.load %arg12[%c0_45, %c0_46] : memref<2x128xf32, #tpu.memory_space<vmem>>, vector<2x128xf32>
    tpu.vector_store %arg12[%c0_45, %c0_46], %88 {strides = array<i32>} : memref<2x128xf32, #tpu.memory_space<vmem>>, vector<2x128xf32>,
    return
  }
}

</mosaic_0001>

<llo_original>
// kernel: decoder_forward.1
$region0: #{decoder_forward.1}
  #allocation0 [shape = 'u32[]', space=smem, size = 0x4, offset = 0x4, fixed_abs, tag = 'smem constant byte address 0x4 - core index']
  #allocation1 [shape = 'u32[144,128]{1,0:T(1,128)}', space=vmem, size = 0x12000, scoped, tag = 'internal scratch']
  %s0 = inlined_call_operand.vmem [shape: s32[2,1], index: 0, kind: input, shape index: {}]
  %s1 = inlined_call_operand.vmem [shape: f32[64,32], index: 1, kind: input, shape index: {}]
  %s2 = inlined_call_operand.vmem [shape: f32[2,2,32], index: 2, kind: input, shape index: {}, may-alias: {2,10}]
  %s3 = inlined_call_operand.vmem [shape: f32[2,2,32], index: 3, kind: input, shape index: {}, may-alias: {3,11}]
  %s4 = inlined_call_operand.vmem [shape: f32[64,128], index: 4, kind: input, shape index: {}]
  %s5 = inlined_call_operand.hbm [shape: f32[64,128], index: 5, kind: input, shape index: {}]
  %s6 = inlined_call_operand.vmem [shape: f32[1,128], index: 6, kind: input, shape index: {}]
  %s7 = inlined_call_operand.vmem [shape: f32[1,128], index: 7, kind: input, shape index: {}]
  %s8 = inlined_call_operand.vmem [shape: f32[32,128], index: 8, kind: input, shape index: {}]
  %s9 = inlined_call_operand.vmem [shape: f32[1,128], index: 9, kind: input, shape index: {}]
  %s10 = inlined_call_operand.vmem [shape: f32[2,2,32], index: 10, kind: output, shape index: {0}, may-alias: {2,10}]
  %s11 = inlined_call_operand.vmem [shape: f32[2,2,32], index: 11, kind: output, shape index: {1}, may-alias: {3,11}]
  %s12 = inlined_call_operand.hbm [shape: f32[2,128], index: 12, kind: output, shape index: {2}]
  %13 = xla_tuple %s10, %s11, %s12
  %s14 = sld [smem:[#allocation0]]
  $region70: #{decoder_forward.1} parent=0
    _
  %s16 = ssub.s32 1, %s14
  %s17 = scalar_select 0, %s16, %s14
  $region1: #{decoder_forward.1} parent=0
    #allocation2 [shape = 'u8[32768]{0}', space=vmem, size = 0x8000, scoped, tag = 'input window, operand 5, single buffered']
    #allocation3 [shape = 's32[1]{0}', space=sflag, size = 0x4, scoped, tag = 'scoped memory for decoder_forward.1']
    #allocation4 [shape = 's32[1]{0}', space=sflag, size = 0x4, scoped, tag = 'scoped memory for decoder_forward.1']
    #allocation5 [shape = 'u8[1024]{0}', space=vmem, size = 0x400, scoped, tag = 'output window, operand 2, single buffered']
    %18 = vsyncpa [#allocation3], 0
    %19 = vsyncpa [#allocation4], 0
    // Predicated region
    $region2: #{decoder_forward.1} parent=1 // pred_check
      _
    $region3: #{decoder_forward.1} parent=1 // pred_check_branch
      %21 = sbr.rel (0) target = $region5
    $region4: #{decoder_forward.1} parent=1 // pred_region
      _
    $region5: #{decoder_forward.1} parent=1 // pred_fallthru
      _
    // Predicated region
    $region6: #{decoder_forward.1} parent=1 // pred_check
      _
    $region7: #{decoder_forward.1} parent=1 // pred_check_branch
      %23 = sbr.rel (0) target = $region9
    $region8: #{decoder_forward.1} parent=1 // pred_region
      _
    $region9: #{decoder_forward.1} parent=1 // pred_fallthru
      _
    // Predicated region
    $region10: #{decoder_forward.1} parent=1 // pred_check
      _
    $region11: #{decoder_forward.1} parent=1 // pred_check_branch
      %25 = sbr.rel (0) target = $region13
    $region12: #{decoder_forward.1} parent=1 // pred_region
      _
    $region13: #{decoder_forward.1} parent=1 // pred_fallthru
      _
    // Predicated region
    $region14: #{decoder_forward.1} parent=1 // pred_check
      _
    $region15: #{decoder_forward.1} parent=1 // pred_check_branch
      %27 = sbr.rel (0) target = $region17
    $region16: #{decoder_forward.1} parent=1 // pred_region
      _
    $region17: #{decoder_forward.1} parent=1 // pred_fallthru
      _
    // Predicated region
    $region18: #{decoder_forward.1} parent=1 // pred_check
      _
    $region19: #{decoder_forward.1} parent=1 // pred_check_branch
      %29 = sbr.rel (0) target = $region21
    $region20: #{decoder_forward.1} parent=1 // pred_region
      _
    $region21: #{decoder_forward.1} parent=1 // pred_fallthru
      _
    // Predicated region
    $region22: #{decoder_forward.1} parent=1 // pred_check
      _
    $region23: #{decoder_forward.1} parent=1 // pred_check_branch
      %31 = sbr.rel (0) target = $region25
    $region24: #{decoder_forward.1} parent=1 // pred_region
      %s33 = ssub.s32 1024, 1024
      %34 = vsyncadd [#allocation3], %s33
      %s35 = sshll.u32 [#allocation2], 4
      %s36 = int_to_ptr.vmem [resolvable:$true] %s35
      %41 = dma.hbm_to_vmem [thread:$0]  %s5, 1024, %s36, [#allocation3], 128, 128, 8
    $region25: #{decoder_forward.1} parent=1 // pred_fallthru
      _
    // Predicated region
    $region26: #{decoder_forward.1} parent=1 // pred_check
      _
    $region27: #{decoder_forward.1} parent=1 // pred_check_branch
      %43 = sbr.rel (0) target = $region29
    $region28: #{decoder_forward.1} parent=1 // pred_region
      _
    $region29: #{decoder_forward.1} parent=1 // pred_fallthru
      _
    // Predicated region
    $region30: #{decoder_forward.1} parent=1 // pred_check
      _
    $region31: #{decoder_forward.1} parent=1 // pred_check_branch
      %45 = sbr.rel (0) target = $region33
    $region32: #{decoder_forward.1} parent=1 // pred_region
      _
    $region33: #{decoder_forward.1} parent=1 // pred_fallthru
      _
    // Predicated region
    $region34: #{decoder_forward.1} parent=1 // pred_check
      _
    $region35: #{decoder_forward.1} parent=1 // pred_check_branch
      %47 = sbr.rel (0) target = $region37
    $region36: #{decoder_forward.1} parent=1 // pred_region
      _
    $region37: #{decoder_forward.1} parent=1 // pred_fallthru
      _
    // Predicated region
    $region38: #{decoder_forward.1} parent=1 // pred_check
      _
    $region39: #{decoder_forward.1} parent=1 // pred_check_branch
      %49 = sbr.rel (0) target = $region41
    $region40: #{decoder_forward.1} parent=1 // pred_region
      _
    $region41: #{decoder_forward.1} parent=1 // pred_fallthru
      _
    // Predicated region
    $region42: #{decoder_forward.1} parent=1 // pred_check
      _
    $region43: #{decoder_forward.1} parent=1 // pred_check_branch
      %51 = sbr.rel (0) target = $region45
    $region44: #{decoder_forward.1} parent=1 // pred_region
      %52 = dma.done [#allocation3], 1024
    $region45: #{decoder_forward.1} parent=1 // pred_fallthru
      _
    %v53 = vld [vmem:[%s0] sm:$0x3]
    %v54 = vlaneseq
    %v55 = vand.u32 %v54, 127
    %56 = vset.pattern.permute.xlu0 0
    %57 = vperm.xlu0 %56, %v53
    %v58 = vpop.permute.xlu0 %57
    %vm59 = vcmp.eq.s32.totalorder %v58, %v55
    %v60 = vsel %vm59, 1, 0
    %v61 = vcvt.s32.f32 %v60
    %v62 = vld [vmem:[%s1] sm:$0xff]
    %v63 = vld [vmem:[%s1 + $0x8] sm:$0xff]
    %v64 = vld [vmem:[%s1 + $0x10] sm:$0xff]
    %v65 = vld [vmem:[%s1 + $0x18] sm:$0xff]
    %v66 = vld [vmem:[%s1 + $0x20] sm:$0xff]
    %v67 = vld [vmem:[%s1 + $0x28] sm:$0xff]
    %v68 = vld [vmem:[%s1 + $0x30] sm:$0xff]
    %v69 = vld [vmem:[%s1 + $0x38] sm:$0xff]
    %vm70 = vcmask 523264
    %v72 = vsel %vm70, %v61, 0
    %74 = vmatprep.subr.mxu0 0.0
    %75 = vmatpush1.msra.mxu0 0.0
    %76 = vmatprep.subr.mxu0 0.0
    %77 = vmatpush1.msra.mxu0 0.0
    %78 = vmatprep.subr.mxu0 0.0
    %79 = vmatpush1.msra.mxu0 0.0
    %80 = vmatprep.subr.mxu0 0.0
    %81 = vmatpush1.msra.mxu0 0.0
    %82 = vmatprep.subr.mxu0 0.0
    %83 = vmatpush1.msra.mxu0 0.0
    %84 = vmatprep.subr.mxu0 0.0
    %85 = vmatpush1.msra.mxu0 0.0
    %86 = vmatprep.subr.mxu0 0.0
    %87 = vmatpush1.msra.mxu0 0.0
    %88 = vmatprep.subr.mxu0 0.0
    %89 = vmatpush1.msra.mxu0 0.0
    %90 = vmatprep.subr.mxu0 0.0
    %91 = vmatpush1.msra.mxu0 %v69
    %92 = vmatprep.subr.mxu0 0.0
    %93 = vmatpush1.msra.mxu0 %v68
    %94 = vmatprep.subr.mxu0 0.0
    %95 = vmatpush1.msra.mxu0 %v67
    %96 = vmatprep.subr.mxu0 0.0
    %97 = vmatpush1.msra.mxu0 %v66
    %98 = vmatprep.subr.mxu0 0.0
    %99 = vmatpush1.msra.mxu0 %v65
    %100 = vmatprep.subr.mxu0 0.0
    %101 = vmatpush1.msra.mxu0 %v64
    %102 = vmatprep.subr.mxu0 0.0
    %103 = vmatpush1.msra.mxu0 %v63
    %104 = vmatprep.subr.mxu0 0.0
    %105 = vmatpush1.msra.mxu0 %v62
    %106 = vmatprep.subr.mxu0 0.0
    %107 = vmatpush2.msra.mxu0 0.0
    %108 = vmatprep.subr.mxu0 0.0
    %109 = vmatpush2.msra.mxu0 0.0
    %110 = vmatprep.subr.mxu0 0.0
    %111 = vmatpush2.msra.mxu0 0.0
    %112 = vmatprep.subr.mxu0 0.0
    %113 = vmatpush2.msra.mxu0 0.0
    %114 = vmatprep.subr.mxu0 0.0
    %115 = vmatpush2.msra.mxu0 0.0
    %116 = vmatprep.subr.mxu0 0.0
    %117 = vmatpush2.msra.mxu0 0.0
    %118 = vmatprep.subr.mxu0 0.0
    %119 = vmatpush2.msra.mxu0 0.0
    %120 = vmatprep.subr.mxu0 0.0
    %121 = vmatpush2.msra.mxu0 0.0
    %122 = vmatprep.subr.mxu0 0.0
    %123 = vmatpush2.msra.mxu0 0.0
    %124 = vmatprep.subr.mxu0 0.0
    %125 = vmatpush2.msra.mxu0 0.0
    %126 = vmatprep.subr.mxu0 0.0
    %127 = vmatpush2.msra.mxu0 0.0
    %128 = vmatprep.subr.mxu0 0.0
    %129 = vmatpush2.msra.mxu0 0.0
    %130 = vmatprep.subr.mxu0 0.0
    %131 = vmatpush2.msra.mxu0 0.0
    %132 = vmatprep.subr.mxu0 0.0
    %133 = vmatpush2.msra.mxu0 0.0
    %134 = vmatprep.subr.mxu0 0.0
    %135 = vmatpush2.msra.mxu0 0.0
    %136 = vmatprep.subr.mxu0 0.0
    %137 = vmatpush2.msra.mxu0 0.0
    %138 = vmatprep.mubr.f32.mxu0 0.0
    %139 = vmatmul.mubr.f32.gmra.mxu0 %v72
    %v140 = vpop.f32.mrf.mxu0
    %v141 = vadd.f32 0.0, %v140
    %v142 = vpop.f32.mrf.mxu0
    %143 = vdwg.mxu0
    %v144 = vld [vmem:[%s2] sm:$0x3]
    %v145 = vld [vmem:[%s3] sm:$0x3]
    %147 = vrot.lane.b32.xlu0 %v144, 32
    %v148 = vpop.permute.xlu0 %147
    %vm150 = vcmask 261120
    %v151 = vsel %vm150, %v141, %v148
    %v152 = vld [vmem:[%s4] sm:$0xff]
    %v153 = vld [vmem:[%s4 + $0x8] sm:$0xff]
    %v154 = vld [vmem:[%s4 + $0x10] sm:$0xff]
    %v155 = vld [vmem:[%s4 + $0x18] sm:$0xff]
    %v156 = vld [vmem:[%s4 + $0x20] sm:$0xff]
    %v157 = vld [vmem:[%s4 + $0x28] sm:$0xff]
    %v158 = vld [vmem:[%s4 + $0x30] sm:$0xff]
    %v159 = vld [vmem:[%s4 + $0x38] sm:$0xff]
    %v160 = vld [vmem:[%s6] sm:$0x1]
    %v162 = vlaneseq
    %v163 = vshrl.u32 %v162, 7
    %v164 = vsub.s32 0, %v163
    %v165 = vrot.slane %v160, %v164
    %v168 = vsel %vm70, %v151, 0
    %170 = vmatprep.subr.mxu0 0.0
    %171 = vmatpush1.msra.mxu0 0.0
    %172 = vmatprep.subr.mxu0 0.0
    %173 = vmatpush1.msra.mxu0 0.0
    %174 = vmatprep.subr.mxu0 0.0
    %175 = vmatpush1.msra.mxu0 0.0
    %176 = vmatprep.subr.mxu0 0.0
    %177 = vmatpush1.msra.mxu0 0.0
    %178 = vmatprep.subr.mxu0 0.0
    %179 = vmatpush1.msra.mxu0 0.0
    %180 = vmatprep.subr.mxu0 0.0
    %181 = vmatpush1.msra.mxu0 0.0
    %182 = vmatprep.subr.mxu0 0.0
    %183 = vmatpush1.msra.mxu0 0.0
    %184 = vmatprep.subr.mxu0 0.0
    %185 = vmatpush1.msra.mxu0 0.0
    %186 = vmatprep.subr.mxu0 0.0
    %187 = vmatpush1.msra.mxu0 %v159
    %188 = vmatprep.subr.mxu0 0.0
    %189 = vmatpush1.msra.mxu0 %v158
    %190 = vmatprep.subr.mxu0 0.0
    %191 = vmatpush1.msra.mxu0 %v157
    %192 = vmatprep.subr.mxu0 0.0
    %193 = vmatpush1.msra.mxu0 %v156
    %194 = vmatprep.subr.mxu0 0.0
    %195 = vmatpush1.msra.mxu0 %v155
    %196 = vmatprep.subr.mxu0 0.0
    %197 = vmatpush1.msra.mxu0 %v154
    %198 = vmatprep.subr.mxu0 0.0
    %199 = vmatpush1.msra.mxu0 %v153
    %200 = vmatprep.subr.mxu0 0.0
    %201 = vmatpush1.msra.mxu0 %v152
    %202 = vmatprep.subr.mxu0 0.0
    %203 = vmatpush2.msra.mxu0 0.0
    %204 = vmatprep.subr.mxu0 0.0
    %205 = vmatpush2.msra.mxu0 0.0
    %206 = vmatprep.subr.mxu0 0.0
    %207 = vmatpush2.msra.mxu0 0.0
    %208 = vmatprep.subr.mxu0 0.0
    %209 = vmatpush2.msra.mxu0 0.0
    %210 = vmatprep.subr.mxu0 0.0
    %211 = vmatpush2.msra.mxu0 0.0
    %212 = vmatprep.subr.mxu0 0.0
    %213 = vmatpush2.msra.mxu0 0.0
    %214 = vmatprep.subr.mxu0 0.0
    %215 = vmatpush2.msra.mxu0 0.0
    %216 = vmatprep.subr.mxu0 0.0
    %217 = vmatpush2.msra.mxu0 0.0
    %218 = vmatprep.subr.mxu0 0.0
    %219 = vmatpush2.msra.mxu0 0.0
    %220 = vmatprep.subr.mxu0 0.0
    %221 = vmatpush2.msra.mxu0 0.0
    %222 = vmatprep.subr.mxu0 0.0
    %223 = vmatpush2.msra.mxu0 0.0
    %224 = vmatprep.subr.mxu0 0.0
    %225 = vmatpush2.msra.mxu0 0.0
    %226 = vmatprep.subr.mxu0 0.0
    %227 = vmatpush2.msra.mxu0 0.0
    %228 = vmatprep.subr.mxu0 0.0
    %229 = vmatpush2.msra.mxu0 0.0
    %230 = vmatprep.subr.mxu0 0.0
    %231 = vmatpush2.msra.mxu0 0.0
    %232 = vmatprep.subr.mxu0 0.0
    %233 = vmatpush2.msra.mxu0 0.0
    %234 = vmatprep.mubr.f32.mxu0 0.0
    %235 = vmatmul.mubr.f32.gmra.mxu0 %v168
    %v236 = vpop.f32.mrf.mxu0
    %v237 = vadd.f32 %v165, %v236
    %v238 = vpop.f32.mrf.mxu0
    %239 = vdwg.mxu0
    %vm240 = vcmp.ge.s32.totalorder %v55, 64
    %vm241 = vcmp.lt.s32.totalorder %v55, 96
    %vm242 = vmand %vm240, %vm241
    %v243 = vtanh.pop %v237
    %v244 = vxor.u32 %v237, 2147483648
    %v245 = vmul.f32 %v244, 1.442695
    %v246 = vpow.pop %v245
    %v247 = vadd.f32 %v246, 1.0
    %v248 = vrcp.pop %v247
    %v249 = vmul.f32 1.0, %v248
    %v250 = vsel %vm242, %v243, %v249
    %252 = vrot.lane.b32.xlu0 %v145, 32
    %v253 = vpop.permute.xlu0 %252
    %v255 = vmul.f32 %v250, %v253
    %257 = vrot.lane.b32.xlu0 %v250, 64
    %v258 = vpop.permute.xlu0 %257
    %v260 = vmul.f32 %v250, %v258
    %262 = vrot.lane.b32.xlu0 %v260, 32
    %v263 = vpop.permute.xlu0 %262
    %v265 = vadd.f32 %v255, %v263
    %v266 = vtanh.pop %v265
    %268 = vrot.lane.b32.xlu0 %v266, 64
    %v269 = vpop.permute.xlu0 %268
    %v271 = vmul.f32 %v250, %v269
    %273 = vrot.lane.b32.xlu0 %v271, 32
    %v274 = vpop.permute.xlu0 %273
    %vm276 = vcmask 254976
    %277 = vst.msk [vmem:[%s10] sm:$0x3] %vm276, %v274
    %279 = vrot.lane.b32.xlu0 %v265, 96
    %v280 = vpop.permute.xlu0 %279
    %282 = vst.msk [vmem:[%s11] sm:$0x3] %vm276, %v280
    %s283 = scalar_lea.vmem %s2, 2
    %v284 = vld [vmem:[%s283] sm:$0x3]
    %s285 = scalar_lea.vmem %s3, 2
    %v286 = vld [vmem:[%s285] sm:$0x3]
    %288 = vrot.lane.b32.xlu0 %v284, 32
    %v289 = vpop.permute.xlu0 %288
    %v291 = vsel %vm150, %v274, %v289
    %v292 = vld [vmem:[#allocation2] sm:$0xff]
    %v293 = vld [vmem:[#allocation2 + $0x8] sm:$0xff]
    %v294 = vld [vmem:[#allocation2 + $0x10] sm:$0xff]
    %v295 = vld [vmem:[#allocation2 + $0x18] sm:$0xff]
    %v296 = vld [vmem:[#allocation2 + $0x20] sm:$0xff]
    %v297 = vld [vmem:[#allocation2 + $0x28] sm:$0xff]
    %v298 = vld [vmem:[#allocation2 + $0x30] sm:$0xff]
    %v299 = vld [vmem:[#allocation2 + $0x38] sm:$0xff]
    %v300 = vld [vmem:[%s7] sm:$0x1]
    %v302 = vlaneseq
    %v303 = vshrl.u32 %v302, 7
    %v304 = vsub.s32 0, %v303
    %v305 = vrot.slane %v300, %v304
    %v308 = vsel %vm70, %v291, 0
    %310 = vmatprep.subr.mxu0 0.0
    %311 = vmatpush1.msra.mxu0 0.0
    %312 = vmatprep.subr.mxu0 0.0
    %313 = vmatpush1.msra.mxu0 0.0
    %314 = vmatprep.subr.mxu0 0.0
    %315 = vmatpush1.msra.mxu0 0.0
    %316 = vmatprep.subr.mxu0 0.0
    %317 = vmatpush1.msra.mxu0 0.0
    %318 = vmatprep.subr.mxu0 0.0
    %319 = vmatpush1.msra.mxu0 0.0
    %320 = vmatprep.subr.mxu0 0.0
    %321 = vmatpush1.msra.mxu0 0.0
    %322 = vmatprep.subr.mxu0 0.0
    %323 = vmatpush1.msra.mxu0 0.0
    %324 = vmatprep.subr.mxu0 0.0
    %325 = vmatpush1.msra.mxu0 0.0
    %326 = vmatprep.subr.mxu0 0.0
    %327 = vmatpush1.msra.mxu0 %v299
    %328 = vmatprep.subr.mxu0 0.0
    %329 = vmatpush1.msra.mxu0 %v298
    %330 = vmatprep.subr.mxu0 0.0
    %331 = vmatpush1.msra.mxu0 %v297
    %332 = vmatprep.subr.mxu0 0.0
    %333 = vmatpush1.msra.mxu0 %v296
    %334 = vmatprep.subr.mxu0 0.0
    %335 = vmatpush1.msra.mxu0 %v295
    %336 = vmatprep.subr.mxu0 0.0
    %337 = vmatpush1.msra.mxu0 %v294
    %338 = vmatprep.subr.mxu0 0.0
    %339 = vmatpush1.msra.mxu0 %v293
    %340 = vmatprep.subr.mxu0 0.0
    %341 = vmatpush1.msra.mxu0 %v292
    %342 = vmatprep.subr.mxu0 0.0
    %343 = vmatpush2.msra.mxu0 0.0
    %344 = vmatprep.subr.mxu0 0.0
    %345 = vmatpush2.msra.mxu0 0.0
    %346 = vmatprep.subr.mxu0 0.0
    %347 = vmatpush2.msra.mxu0 0.0
    %348 = vmatprep.subr.mxu0 0.0
    %349 = vmatpush2.msra.mxu0 0.0
    %350 = vmatprep.subr.mxu0 0.0
    %351 = vmatpush2.msra.mxu0 0.0
    %352 = vmatprep.subr.mxu0 0.0
    %353 = vmatpush2.msra.mxu0 0.0
    %354 = vmatprep.subr.mxu0 0.0
    %355 = vmatpush2.msra.mxu0 0.0
    %356 = vmatprep.subr.mxu0 0.0
    %357 = vmatpush2.msra.mxu0 0.0
    %358 = vmatprep.subr.mxu0 0.0
    %359 = vmatpush2.msra.mxu0 0.0
    %360 = vmatprep.subr.mxu0 0.0
    %361 = vmatpush2.msra.mxu0 0.0
    %362 = vmatprep.subr.mxu0 0.0
    %363 = vmatpush2.msra.mxu0 0.0
    %364 = vmatprep.subr.mxu0 0.0
    %365 = vmatpush2.msra.mxu0 0.0
    %366 = vmatprep.subr.mxu0 0.0
    %367 = vmatpush2.msra.mxu0 0.0
    %368 = vmatprep.subr.mxu0 0.0
    %369 = vmatpush2.msra.mxu0 0.0
    %370 = vmatprep.subr.mxu0 0.0
    %371 = vmatpush2.msra.mxu0 0.0
    %372 = vmatprep.subr.mxu0 0.0
    %373 = vmatpush2.msra.mxu0 0.0
    %374 = vmatprep.mubr.f32.mxu0 0.0
    %375 = vmatmul.mubr.f32.gmra.mxu0 %v308
    %v376 = vpop.f32.mrf.mxu0
    %v377 = vadd.f32 %v305, %v376
    %v378 = vpop.f32.mrf.mxu0
    %379 = vdwg.mxu0
    %v380 = vtanh.pop %v377
    %v381 = vxor.u32 %v377, 2147483648
    %v382 = vmul.f32 %v381, 1.442695
    %v383 = vpow.pop %v382
    %v384 = vadd.f32 %v383, 1.0
    %v385 = vrcp.pop %v384
    %v386 = vmul.f32 1.0, %v385
    %v387 = vsel %vm242, %v380, %v386
    %389 = vrot.lane.b32.xlu0 %v286, 32
    %v390 = vpop.permute.xlu0 %389
    %v392 = vmul.f32 %v387, %v390
    %394 = vrot.lane.b32.xlu0 %v387, 64
    %v395 = vpop.permute.xlu0 %394
    %v397 = vmul.f32 %v387, %v395
    %399 = vrot.lane.b32.xlu0 %v397, 32
    %v400 = vpop.permute.xlu0 %399
    %v402 = vadd.f32 %v392, %v400
    %v403 = vtanh.pop %v402
    %405 = vrot.lane.b32.xlu0 %v403, 64
    %v406 = vpop.permute.xlu0 %405
    %v408 = vmul.f32 %v387, %v406
    %410 = vrot.lane.b32.xlu0 %v408, 32
    %v411 = vpop.permute.xlu0 %410
    %s413 = scalar_lea.vmem %s10, 2
    %414 = vst.msk [vmem:[%s413] sm:$0x3] %vm276, %v411
    %416 = vrot.lane.b32.xlu0 %v402, 96
    %v417 = vpop.permute.xlu0 %416
    %s419 = scalar_lea.vmem %s11, 2
    %420 = vst.msk [vmem:[%s419] sm:$0x3] %vm276, %v417
    %v421 = vld [vmem:[%s8] sm:$0xff]
    %v422 = vld [vmem:[%s8 + $0x8] sm:$0xff]
    %v423 = vld [vmem:[%s8 + $0x10] sm:$0xff]
    %v424 = vld [vmem:[%s8 + $0x18] sm:$0xff]
    %v425 = vld [vmem:[%s9] sm:$0x1]
    %v427 = vlaneseq
    %v428 = vshrl.u32 %v427, 7
    %v429 = vsub.s32 0, %v428
    %v430 = vrot.slane %v425, %v429
    %v432 = vsel %vm150, %v411, 0
    %434 = vmatprep.subr.mxu0 0.0
    %435 = vmatpush1.msra.mxu0 0.0
    %436 = vmatprep.subr.mxu0 0.0
    %437 = vmatpush1.msra.mxu0 0.0
    %438 = vmatprep.subr.mxu0 0.0
    %439 = vmatpush1.msra.mxu0 0.0
    %440 = vmatprep.subr.mxu0 0.0
    %441 = vmatpush1.msra.mxu0 0.0
    %442 = vmatprep.subr.mxu0 0.0
    %443 = vmatpush1.msra.mxu0 0.0
    %444 = vmatprep.subr.mxu0 0.0
    %445 = vmatpush1.msra.mxu0 0.0
    %446 = vmatprep.subr.mxu0 0.0
    %447 = vmatpush1.msra.mxu0 0.0
    %448 = vmatprep.subr.mxu0 0.0
    %449 = vmatpush1.msra.mxu0 0.0
    %450 = vmatprep.subr.mxu0 0.0
    %451 = vmatpush1.msra.mxu0 0.0
    %452 = vmatprep.subr.mxu0 0.0
    %453 = vmatpush1.msra.mxu0 0.0
    %454 = vmatprep.subr.mxu0 0.0
    %455 = vmatpush1.msra.mxu0 0.0
    %456 = vmatprep.subr.mxu0 0.0
    %457 = vmatpush1.msra.mxu0 0.0
    %458 = vmatprep.subr.mxu0 0.0
    %459 = vmatpush1.msra.mxu0 %v424
    %460 = vmatprep.subr.mxu0 0.0
    %461 = vmatpush1.msra.mxu0 %v423
    %462 = vmatprep.subr.mxu0 0.0
    %463 = vmatpush1.msra.mxu0 %v422
    %464 = vmatprep.subr.mxu0 0.0
    %465 = vmatpush1.msra.mxu0 %v421
    %466 = vmatprep.subr.mxu0 0.0
    %467 = vmatpush2.msra.mxu0 0.0
    %468 = vmatprep.subr.mxu0 0.0
    %469 = vmatpush2.msra.mxu0 0.0
    %470 = vmatprep.subr.mxu0 0.0
    %471 = vmatpush2.msra.mxu0 0.0
    %472 = vmatprep.subr.mxu0 0.0
    %473 = vmatpush2.msra.mxu0 0.0
    %474 = vmatprep.subr.mxu0 0.0
    %475 = vmatpush2.msra.mxu0 0.0
    %476 = vmatprep.subr.mxu0 0.0
    %477 = vmatpush2.msra.mxu0 0.0
    %478 = vmatprep.subr.mxu0 0.0
    %479 = vmatpush2.msra.mxu0 0.0
    %480 = vmatprep.subr.mxu0 0.0
    %481 = vmatpush2.msra.mxu0 0.0
    %482 = vmatprep.subr.mxu0 0.0
    %483 = vmatpush2.msra.mxu0 0.0
    %484 = vmatprep.subr.mxu0 0.0
    %485 = vmatpush2.msra.mxu0 0.0
    %486 = vmatprep.subr.mxu0 0.0
    %487 = vmatpush2.msra.mxu0 0.0
    %488 = vmatprep.subr.mxu0 0.0
    %489 = vmatpush2.msra.mxu0 0.0
    %490 = vmatprep.subr.mxu0 0.0
    %491 = vmatpush2.msra.mxu0 0.0
    %492 = vmatprep.subr.mxu0 0.0
    %493 = vmatpush2.msra.mxu0 0.0
    %494 = vmatprep.subr.mxu0 0.0
    %495 = vmatpush2.msra.mxu0 0.0
    %496 = vmatprep.subr.mxu0 0.0
    %497 = vmatpush2.msra.mxu0 0.0
    %498 = vmatprep.mubr.f32.mxu0 0.0
    %499 = vmatmul.mubr.f32.gmra.mxu0 %v432
    %v500 = vpop.f32.mrf.mxu0
    %v501 = vadd.f32 %v430, %v500
    %v502 = vpop.f32.mrf.mxu0
    %503 = vdwg.mxu0
    %504 = vst [vmem:[#allocation5] sm:$0x3] %v501
    // Predicated region
    $region46: #{decoder_forward.1} parent=1 // pred_check
      _
    $region47: #{decoder_forward.1} parent=1 // pred_check_branch
      %506 = sbr.rel (0) target = $region49
    $region48: #{decoder_forward.1} parent=1 // pred_region
      _
    $region49: #{decoder_forward.1} parent=1 // pred_fallthru
      _
    // Predicated region
    $region50: #{decoder_forward.1} parent=1 // pred_check
      _
    $region51: #{decoder_forward.1} parent=1 // pred_check_branch
      %508 = sbr.rel (0) target = $region53
    $region52: #{decoder_forward.1} parent=1 // pred_region
      _
    $region53: #{decoder_forward.1} parent=1 // pred_fallthru
      _
    // Predicated region
    $region54: #{decoder_forward.1} parent=1 // pred_check
      _
    $region55: #{decoder_forward.1} parent=1 // pred_check_branch
      %510 = sbr.rel (0) target = $region57
    $region56: #{decoder_forward.1} parent=1 // pred_region
      %s512 = ssub.s32 32, 32
      %513 = vsyncadd [#allocation4], %s512
      %s515 = sshll.u32 [#allocation5], 4
      %s516 = int_to_ptr.vmem [resolvable:$true] %s515
      %518 = dma.vmem_to_hbm [thread:$0]  %s516, 32, %s12, [#allocation4]
    $region57: #{decoder_forward.1} parent=1 // pred_fallthru
      _
    // Predicated region
    $region58: #{decoder_forward.1} parent=1 // pred_check
      _
    $region59: #{decoder_forward.1} parent=1 // pred_check_branch
      %520 = sbr.rel (0) target = $region61
    $region60: #{decoder_forward.1} parent=1 // pred_region
      _
    $region61: #{decoder_forward.1} parent=1 // pred_fallthru
      _
    // Predicated region
    $region62: #{decoder_forward.1} parent=1 // pred_check
      _
    $region63: #{decoder_forward.1} parent=1 // pred_check_branch
      %522 = sbr.rel (0) target = $region65
    $region64: #{decoder_forward.1} parent=1 // pred_region
      _
    $region65: #{decoder_forward.1} parent=1 // pred_fallthru
      _
    // Predicated region
    $region66: #{decoder_forward.1} parent=1 // pred_check
      _
    $region67: #{decoder_forward.1} parent=1 // pred_check_branch
      %524 = sbr.rel (0) target = $region69
    $region68: #{decoder_forward.1} parent=1 // pred_region
      %525 = dma.done [#allocation4], 32
    $region69: #{decoder_forward.1} parent=1 // pred_fallthru
      _
    %526 = vsyncpa [#allocation3], 1
    %527 = vsyncpa [#allocation4], 1

</llo_original>
